<compile_context>
chip_gen: v6e
topology: v6e:2x2x1
jax: 0.10.0
libtpu: 0.0.40
codegen_flags: <defaults>
</compile_context>

<pallas_src>
import functools

import jax
import jax.numpy as jnp
from jax.experimental import pallas as pl
from jax.experimental.pallas import tpu as pltpu

BN_EPS = 1e-5
COMPUTE_DTYPE = jnp.bfloat16          # MXU operand dtype (accumulation stays f32)
SUBLANE = 8

SINGLE_PASS_VMEM_BYTES = 8 * 1024 * 1024   # fused fast-path threshold
TARGET_STEP_BYTES = 4 << 20                # ~4 MiB HBM traffic per grid step
VMEM_TILE_BUDGET = 20 << 20                # cap per-step VMEM working set
MAX_TILE_N = 8192
MIN_TILE_N = 1024


def _round_up(x, m):
    return ((x + m - 1) // m) * m


def _auto_tile_n(n, c_in, c_out, x_itemsize, out_itemsize):
    """Size the N tile from per-step HBM bytes, capped by a VMEM budget."""
    per_row_hbm = c_in * x_itemsize + c_out * out_itemsize
    per_row_vmem = (2 * c_in * 4            # x blocks (double-buffered, f32)
                    + 2 * c_out * out_itemsize   # out blocks
                    + c_out * 4                  # f32 y temp
                    + c_in * 2)                  # bf16 cast of x
    tn = TARGET_STEP_BYTES // per_row_hbm
    tn = min(tn, VMEM_TILE_BUDGET // per_row_vmem, MAX_TILE_N)
    tn = max(tn, MIN_TILE_N)
    return tn


def _vmem_limit_bytes(tn, c_in, c_out, out_itemsize, num_tiles):
    est = (2 * tn * c_in * 4
           + 2 * tn * c_out * out_itemsize
           + 2 * tn * c_out * 4
           + 2 * c_in * c_out * 2
           + 2 * num_tiles * 2 * c_out * 4
           + 8 * c_out * 4)
    return int(min(max(2 * est, 32 * 1024 * 1024), 48 * 1024 * 1024))


# ---------------------------------------------------------------------------
# Single-pass fused kernel (small N*C): matmul + BN stats + normalize.
# ---------------------------------------------------------------------------
def _fused_kernel(x_ref, w_ref, gamma_ref, beta_ref, o_ref, *, n, eps):
    y = jnp.dot(x_ref[...].astype(COMPUTE_DTYPE), w_ref[...],
                preferred_element_type=jnp.float32)            # (N, C) f32
    inv_n = 1.0 / n
    mean = jnp.sum(y, axis=0, keepdims=True) * inv_n           # (1, C)
    ex2 = jnp.sum(y * y, axis=0, keepdims=True) * inv_n
    var = jnp.maximum(ex2 - mean * mean, 0.0)
    scale = gamma_ref[...] * jax.lax.rsqrt(var + eps)          # (1, C)
    shift = beta_ref[...] - mean * scale
    o_ref[...] = (y * scale + shift).astype(o_ref.dtype)


# ---------------------------------------------------------------------------
# Pass 1: per-N-tile partial BN statistics of y = x @ W (tail rows masked).
# ---------------------------------------------------------------------------
def _stats_kernel(x_ref, w_ref, stats_ref, *, n, tn):
    y = jnp.dot(x_ref[...].astype(COMPUTE_DTYPE), w_ref[...],
                preferred_element_type=jnp.float32)            # (TN, C) f32
    if n % tn:   # static: masking only emitted when a ragged tail tile exists
        rows = jax.lax.broadcasted_iota(jnp.int32, y.shape, 0)
        valid = (pl.program_id(0) * tn + rows) < n
        y = jnp.where(valid, y, 0.0)
    stats_ref[0, 0:1, :] = jnp.sum(y, axis=0, keepdims=True)
    stats_ref[0, 1:2, :] = jnp.sum(y * y, axis=0, keepdims=True)


# ---------------------------------------------------------------------------
# Pass 2: fold stats into per-channel scale/shift in-kernel, recompute y,
#         apply affine.  Out-of-bounds tail-row stores are dropped by Pallas.
# ---------------------------------------------------------------------------
def _normalize_kernel(x_ref, w_ref, stats_ref, gamma_ref, beta_ref, o_ref,
                      *, n, eps):
    inv_n = 1.0 / n
    stats = stats_ref[...]                                     # (T, 2, C) f32
    mean = jnp.sum(stats[:, 0, :], axis=0, keepdims=True) * inv_n   # (1, C)
    ex2 = jnp.sum(stats[:, 1, :], axis=0, keepdims=True) * inv_n
    # NOTE: E[y^2] - mean^2 is less stable than the centered form when
    # |mean| >> std; fine in f32 at typical activation scales.
    var = jnp.maximum(ex2 - mean * mean, 0.0)
    scale = gamma_ref[...] * jax.lax.rsqrt(var + eps)          # (1, C)
    shift = beta_ref[...] - mean * scale
    y = jnp.dot(x_ref[...].astype(COMPUTE_DTYPE), w_ref[...],
                preferred_element_type=jnp.float32)            # (TN, C) f32
    o_ref[...] = (y * scale + shift).astype(o_ref.dtype)


def graph_conv_bn(x, weight, gamma, beta, *, tile_n=None, eps=BN_EPS,
                  single_pass=None):
    """x: (N, C_in); weight: (C_out, C_in) (PyTorch Linear layout, no bias);
    gamma/beta: (C_out,).  Returns (N, C_out) in x.dtype."""
    n, c_in = x.shape
    c_out = weight.shape[0]
    out_dtype = x.dtype
    out_itemsize = jnp.dtype(out_dtype).itemsize
    x_itemsize = jnp.dtype(x.dtype).itemsize

    # --- parameter prep (hoist to init/param-prep time in a real model) ----
    w_t = jnp.asarray(weight, jnp.float32).T.astype(COMPUTE_DTYPE)   # (Cin, Cout)
    gamma2 = jnp.asarray(gamma, jnp.float32).reshape(1, c_out)
    beta2 = jnp.asarray(beta, jnp.float32).reshape(1, c_out)

    # --- single-pass fast path (launch/latency-dominated small shapes) -----
    fused_bytes = (n * c_in * 4 + n * c_out * 4 + n * c_out * out_itemsize
                   + c_in * c_out * 2)
    if single_pass is None:
        single_pass = fused_bytes <= SINGLE_PASS_VMEM_BYTES
    if single_pass:
        return pl.pallas_call(
            functools.partial(_fused_kernel, n=n, eps=eps),
            out_shape=jax.ShapeDtypeStruct((n, c_out), out_dtype),
            grid=(1,),
            in_specs=[
                pl.BlockSpec((n, c_in), lambda i: (0, 0)),
                pl.BlockSpec((c_in, c_out), lambda i: (0, 0)),
                pl.BlockSpec((1, c_out), lambda i: (0, 0)),
                pl.BlockSpec((1, c_out), lambda i: (0, 0)),
            ],
            out_specs=pl.BlockSpec((n, c_out), lambda i: (0, 0)),
            compiler_params=pltpu.CompilerParams(
                vmem_limit_bytes=32 * 1024 * 1024),
        )(x, w_t, gamma2, beta2)

    # --- two-pass path: pick the N tile from per-step HBM bytes ------------
    if tile_n is None:
        tn = _auto_tile_n(n, c_in, c_out, x_itemsize, out_itemsize)
    else:
        tn = int(tile_n)
    tn = min(tn, _round_up(n, SUBLANE))
    tn = _round_up(max(tn, SUBLANE), SUBLANE)
    num_tiles = pl.cdiv(n, tn)

    compiler_params = pltpu.CompilerParams(
        dimension_semantics=("parallel",),
        vmem_limit_bytes=_vmem_limit_bytes(tn, c_in, c_out, out_itemsize,
                                           num_tiles),
    )

    # --- pass 1: per-tile partial sum / sumsq per output channel -----------
    partial_stats = pl.pallas_call(
        functools.partial(_stats_kernel, n=n, tn=tn),
        out_shape=jax.ShapeDtypeStruct((num_tiles, 2, c_out), jnp.float32),
        grid_spec=pltpu.PrefetchScalarGridSpec(
            num_scalar_prefetch=0,
            grid=(num_tiles,),
            in_specs=[
                pl.BlockSpec((tn, c_in), lambda i: (i, 0)),
                pl.BlockSpec((c_in, c_out), lambda i: (0, 0)),
            ],
            out_specs=pl.BlockSpec((1, 2, c_out), lambda i: (i, 0, 0)),
        ),
        compiler_params=compiler_params,
    )(x, w_t)

    # --- pass 2: in-kernel stat fold + normalize (unpadded output) ---------
    out = pl.pallas_call(
        functools.partial(_normalize_kernel, n=n, eps=eps),
        out_shape=jax.ShapeDtypeStruct((n, c_out), out_dtype),
        grid_spec=pltpu.PrefetchScalarGridSpec(
            num_scalar_prefetch=0,
            grid=(num_tiles,),
            in_specs=[
                pl.BlockSpec((tn, c_in), lambda i: (i, 0)),
                pl.BlockSpec((c_in, c_out), lambda i: (0, 0)),
                pl.BlockSpec((num_tiles, 2, c_out), lambda i: (0, 0, 0)),
                pl.BlockSpec((1, c_out), lambda i: (0, 0)),
                pl.BlockSpec((1, c_out), lambda i: (0, 0)),
            ],
            out_specs=pl.BlockSpec((tn, c_out), lambda i: (i, 0)),
        ),
        compiler_params=compiler_params,
    )(x, w_t, partial_stats, gamma2, beta2)
    return out


def reference(x, weight, gamma, beta, eps=BN_EPS):
    """Same compute precision as the kernel (bf16 matmul operands, f32
    accumulation), stable centered-variance BatchNorm form."""
    y = jnp.dot(x.astype(COMPUTE_DTYPE), weight.T.astype(COMPUTE_DTYPE),
                preferred_element_type=jnp.float32)
    mean = jnp.mean(y, axis=0, keepdims=True)
    var = jnp.mean((y - mean) ** 2, axis=0, keepdims=True)
    y_hat = (y - mean) * jax.lax.rsqrt(var + eps)
    return y_hat * gamma[None, :] + beta[None, :]


if __name__ == "__main__":
    key = jax.random.PRNGKey(0)

    # ---- case 1: module-native small shapes -> single-pass fast path ------
    N, C_IN, C_OUT = 128, 32, 64
    kx, kw, key = jax.random.split(key, 3)
    x = jax.random.normal(kx, (N, C_IN), dtype=jnp.float32)
    bound = 1.0 / (C_IN ** 0.5)
    weight = jax.random.uniform(kw, (C_OUT, C_IN), jnp.float32, -bound, bound)
    gamma = jnp.ones((C_OUT,), jnp.float32)
    beta = jnp.zeros((C_OUT,), jnp.float32)

    out = jax.block_until_ready(graph_conv_bn(x, weight, gamma, beta))
    ref = reference(x, weight, gamma, beta)
    assert out.shape == (N, C_OUT)
    assert jnp.allclose(out, ref, atol=2e-3, rtol=2e-3), (
        float(jnp.max(jnp.abs(out - ref))))

    # ---- case 2: force the two-pass path, exact tile division -------------
    out_b = jax.block_until_ready(
        graph_conv_bn(x, weight, gamma, beta, tile_n=64, single_pass=False))
    assert out_b.shape == (N, C_OUT)
    assert jnp.allclose(out_b, ref, atol=2e-3, rtol=2e-3), (
        float(jnp.max(jnp.abs(out_b - ref))))

    # ---- case 3: two-pass path with ragged tail tile + non-128 C_out ------
    N2, C_IN2, C_OUT2 = 1000, 48, 96
    kx2, kw2, kg2, kb2 = jax.random.split(key, 4)
    x2 = jax.random.normal(kx2, (N2, C_IN2), dtype=jnp.float32)
    bound2 = 1.0 / (C_IN2 ** 0.5)
    weight2 = jax.random.uniform(kw2, (C_OUT2, C_IN2), jnp.float32,
                                 -bound2, bound2)
    gamma2 = 1.0 + 0.1 * jax.random.normal(kg2, (C_OUT2,), dtype=jnp.float32)
    beta2 = 0.1 * jax.random.normal(kb2, (C_OUT2,), dtype=jnp.float32)

    out2 = jax.block_until_ready(
        graph_conv_bn(x2, weight2, gamma2, beta2, tile_n=256,
                      single_pass=False))
    ref2 = reference(x2, weight2, gamma2, beta2)
    assert out2.shape == (N2, C_OUT2)
    assert jnp.allclose(out2, ref2, atol=2e-3, rtol=2e-3), (
        float(jnp.max(jnp.abs(out2 - ref2))))

    print("KERNEL_OK")
</pallas_src>

<mosaic_0001>
module attributes {stable_mosaic.version = 11 : i64} {
  func.func @_fused_kernel(%arg0: i32, %arg1: memref<128x32xf32, #tpu.memory_space<vmem>>, %arg2: memref<32x64xbf16, #tpu.memory_space<vmem>>, %arg3: memref<1x64xf32, #tpu.memory_space<vmem>>, %arg4: memref<1x64xf32, #tpu.memory_space<vmem>>, %arg5: memref<128x64xf32, #tpu.memory_space<vmem>>) attributes {dimension_semantics = [#tpu.dimension_semantics<arbitrary>], iteration_bounds = array<i64: 1>, scalar_prefetch = 0 : i64, scratch_operands = 0 : i64, tpu.core_type = #tpu.core_type<tc>, window_params = [{pipeline_mode = #tpu.pipeline_mode<synchronous>, transform_indices = @transform_0, window_bounds = array<i64: 128, 32>}, {pipeline_mode = #tpu.pipeline_mode<synchronous>, transform_indices = @transform_1, window_bounds = array<i64: 32, 64>}, {pipeline_mode = #tpu.pipeline_mode<synchronous>, transform_indices = @transform_2, window_bounds = array<i64: 1, 64>}, {pipeline_mode = #tpu.pipeline_mode<synchronous>, transform_indices = @transform_3, window_bounds = array<i64: 1, 64>}, {pipeline_mode = #tpu.pipeline_mode<synchronous>, transform_indices = @transform_4, window_bounds = array<i64: 128, 64>}]} {
    %c0 = arith.constant 0 : index
    %c0_0 = arith.constant 0 : index
    %0 = vector.load %arg1[%c0, %c0_0] : memref<128x32xf32, #tpu.memory_space<vmem>>, vector<128x32xf32>
    %1 = arith.truncf %0 : vector<128x32xf32> to vector<128x32xbf16>
    %c0_1 = arith.constant 0 : index
    %c0_2 = arith.constant 0 : index
    %2 = vector.load %arg2[%c0_1, %c0_2] : memref<32x64xbf16, #tpu.memory_space<vmem>>, vector<32x64xbf16>
    %cst = arith.constant dense<0.000000e+00> : vector<128x64xf32>
    %3 = tpu.matmul %1, %2, %cst {dimension_numbers = #tpu.dot_dimension_numbers<[1], [0], [0], [1], [0, 0, 1, 1], [], []>} : vector<128x32xbf16>, vector<32x64xbf16>, vector<128x64xf32> -> vector<128x64xf32>
    %cst_3 = arith.constant dense<0.000000e+00> : vector<64xf32>
    %4 = vector.multi_reduction <add>, %3, %cst_3 [0] : vector<128x64xf32> to vector<64xf32>
    %5 = vector.shape_cast %4 : vector<64xf32> to vector<1x64xf32>
    %cst_4 = arith.constant 7.812500e-03 : f32
    %6 = vector.broadcast %cst_4 : f32 to vector<1x64xf32>
    %7 = arith.mulf %5, %6 : vector<1x64xf32>
    %8 = arith.mulf %3, %3 : vector<128x64xf32>
    %cst_5 = arith.constant dense<0.000000e+00> : vector<64xf32>
    %9 = vector.multi_reduction <add>, %8, %cst_5 [0] : vector<128x64xf32> to vector<64xf32>
    %10 = vector.shape_cast %9 : vector<64xf32> to vector<1x64xf32>
    %cst_6 = arith.constant 7.812500e-03 : f32
    %11 = vector.broadcast %cst_6 : f32 to vector<1x64xf32>
    %12 = arith.mulf %10, %11 : vector<1x64xf32>
    %13 = arith.mulf %7, %7 : vector<1x64xf32>
    %14 = arith.subf %12, %13 : vector<1x64xf32>
    %cst_7 = arith.constant 0.000000e+00 : f32
    %15 = vector.broadcast %cst_7 : f32 to vector<1x64xf32>
    %16 = arith.maximumf %14, %15 : vector<1x64xf32>
    %c0_8 = arith.constant 0 : index
    %c0_9 = arith.constant 0 : index
    %17 = vector.load %arg3[%c0_8, %c0_9] : memref<1x64xf32, #tpu.memory_space<vmem>>, vector<1x64xf32>
    %cst_10 = arith.constant 9.99999974E-6 : f32
    %18 = vector.broadcast %cst_10 : f32 to vector<1x64xf32>
    %19 = arith.addf %16, %18 : vector<1x64xf32>
    %20 = math.rsqrt %19 : vector<1x64xf32>
    %21 = arith.mulf %17, %20 : vector<1x64xf32>
    %c0_11 = arith.constant 0 : index
    %c0_12 = arith.constant 0 : index
    %22 = vector.load %arg4[%c0_11, %c0_12] : memref<1x64xf32, #tpu.memory_space<vmem>>, vector<1x64xf32>
    %23 = arith.mulf %7, %21 : vector<1x64xf32>
    %24 = arith.subf %22, %23 : vector<1x64xf32>
    %25 = vector.broadcast %21 : vector<1x64xf32> to vector<128x64xf32>
    %26 = arith.mulf %3, %25 : vector<128x64xf32>
    %27 = vector.broadcast %24 : vector<1x64xf32> to vector<128x64xf32>
    %28 = arith.addf %26, %27 : vector<128x64xf32>
    %c0_13 = arith.constant 0 : index
    %c0_14 = arith.constant 0 : index
    %29 = vector.load %arg5[%c0_13, %c0_14] : memref<128x64xf32, #tpu.memory_space<vmem>>, vector<128x64xf32>
    tpu.vector_store %arg5[%c0_13, %c0_14], %28 {strides = array<i32>} : memref<128x64xf32, #tpu.memory_space<vmem>>, vector<128x64xf32>,
    return
  }
  func.func @transform_0(%arg0: i32) -> (i32, i32) {
    %c0_i32 = arith.constant 0 : i32
    %c0_i32_0 = arith.constant 0 : i32
    %c0_i32_1 = arith.constant 0 : i32
    return %c0_i32, %c0_i32_0 : i32, i32
  }
  func.func @transform_1(%arg0: i32) -> (i32, i32) {
    %c0_i32 = arith.constant 0 : i32
    %c0_i32_0 = arith.constant 0 : i32
    %c0_i32_1 = arith.constant 0 : i32
    return %c0_i32, %c0_i32_0 : i32, i32
  }
  func.func @transform_2(%arg0: i32) -> (i32, i32) {
    %c0_i32 = arith.constant 0 : i32
    %c0_i32_0 = arith.constant 0 : i32
    %c0_i32_1 = arith.constant 0 : i32
    return %c0_i32, %c0_i32_0 : i32, i32
  }
  func.func @transform_3(%arg0: i32) -> (i32, i32) {
    %c0_i32 = arith.constant 0 : i32
    %c0_i32_0 = arith.constant 0 : i32
    %c0_i32_1 = arith.constant 0 : i32
    return %c0_i32, %c0_i32_0 : i32, i32
  }
  func.func @transform_4(%arg0: i32) -> (i32, i32) {
    %c0_i32 = arith.constant 0 : i32
    %c0_i32_0 = arith.constant 0 : i32
    %c0_i32_1 = arith.constant 0 : i32
    return %c0_i32, %c0_i32_0 : i32, i32
  }
}

</mosaic_0001>

<llo_original>
// kernel: tpu_custom_call.1
$region0: #{tpu_custom_call.1}
  #allocation0 [shape = 'u32[]', space=smem, size = 0x4, offset = 0x4, fixed_abs, tag = 'smem constant byte address 0x4 - core index']
  #allocation1 [shape = 'u32[144,128]{1,0:T(1,128)}', space=vmem, size = 0x12000, scoped, tag = 'internal scratch']
  %s0 = inlined_call_operand.vmem [shape: f32[128,32], index: 0, kind: input, shape index: {}]
  %s1 = inlined_call_operand.vmem [shape: bf16[32,64], index: 1, kind: input, shape index: {}]
  %s2 = inlined_call_operand.vmem [shape: f32[1,64], index: 2, kind: input, shape index: {}]
  %s3 = inlined_call_operand.vmem [shape: f32[1,64], index: 3, kind: input, shape index: {}]
  %s4 = inlined_call_operand.vmem [shape: f32[128,64], index: 4, kind: output, shape index: {}]
  %s5 = sld [smem:[#allocation0]]
  $region26: #{tpu_custom_call.1} parent=0
    _
  %s7 = ssub.s32 1, %s5
  %s8 = scalar_select 0, %s7, %s5
  // Predicated region
  $region2: #{tpu_custom_call.1} parent=0 // pred_check
    _
  $region3: #{tpu_custom_call.1} parent=0 // pred_check_branch
    %10 = sbr.rel (0) target = $region5
  $region4: #{tpu_custom_call.1} parent=0 // pred_region
    _
  $region5: #{tpu_custom_call.1} parent=0 // pred_fallthru
    _
  // Predicated region
  $region6: #{tpu_custom_call.1} parent=0 // pred_check
    _
  $region7: #{tpu_custom_call.1} parent=0 // pred_check_branch
    %12 = sbr.rel (0) target = $region9
  $region8: #{tpu_custom_call.1} parent=0 // pred_region
    _
  $region9: #{tpu_custom_call.1} parent=0 // pred_fallthru
    _
  // Predicated region
  $region10: #{tpu_custom_call.1} parent=0 // pred_check
    _
  $region11: #{tpu_custom_call.1} parent=0 // pred_check_branch
    %14 = sbr.rel (0) target = $region13
  $region12: #{tpu_custom_call.1} parent=0 // pred_region
    _
  $region13: #{tpu_custom_call.1} parent=0 // pred_fallthru
    _
  // Predicated region
  $region14: #{tpu_custom_call.1} parent=0 // pred_check
    _
  $region15: #{tpu_custom_call.1} parent=0 // pred_check_branch
    %16 = sbr.rel (0) target = $region17
  $region16: #{tpu_custom_call.1} parent=0 // pred_region
    _
  $region17: #{tpu_custom_call.1} parent=0 // pred_fallthru
    _
  %v18 = vld [vmem:[%s0] sm:$0xff]
  %v19 = vld [vmem:[%s0 + $0x8] sm:$0xff]
  %v20 = vld [vmem:[%s0 + $0x10] sm:$0xff]
  %v21 = vld [vmem:[%s0 + $0x18] sm:$0xff]
  %v22 = vld [vmem:[%s0 + $0x20] sm:$0xff]
  %v23 = vld [vmem:[%s0 + $0x28] sm:$0xff]
  %v24 = vld [vmem:[%s0 + $0x30] sm:$0xff]
  %v25 = vld [vmem:[%s0 + $0x38] sm:$0xff]
  %v26 = vld [vmem:[%s0 + $0x40] sm:$0xff]
  %v27 = vld [vmem:[%s0 + $0x48] sm:$0xff]
  %v28 = vld [vmem:[%s0 + $0x50] sm:$0xff]
  %v29 = vld [vmem:[%s0 + $0x58] sm:$0xff]
  %v30 = vld [vmem:[%s0 + $0x60] sm:$0xff]
  %v31 = vld [vmem:[%s0 + $0x68] sm:$0xff]
  %v32 = vld [vmem:[%s0 + $0x70] sm:$0xff]
  %v33 = vld [vmem:[%s0 + $0x78] sm:$0xff]
  %v34 = vpack.c.bf16 %v19, %v18
  %v35 = vpack.c.bf16 %v21, %v20
  %v36 = vpack.c.bf16 %v23, %v22
  %v37 = vpack.c.bf16 %v25, %v24
  %v38 = vpack.c.bf16 %v27, %v26
  %v39 = vpack.c.bf16 %v29, %v28
  %v40 = vpack.c.bf16 %v31, %v30
  %v41 = vpack.c.bf16 %v33, %v32
  %v42 = vld [vmem:[%s1] sm:$0xf]
  %v43 = vld [vmem:[%s1 + $0x4] sm:$0xf]
  %v44 = vld [vmem:[%s1 + $0x8] sm:$0xf]
  %v45 = vld [vmem:[%s1 + $0xc] sm:$0xf]
  %v50 = vunpack.c.l.b16 %v42
  %v51 = vunpack.c.l.b16 %v43
  %v52 = vunpack.c.l.b16 %v44
  %v53 = vunpack.c.l.b16 %v45
  %v54 = vpack.c.b16 %v51, %v50
  %v55 = vpack.c.b16 %v53, %v52
  %vm58 = vcmask 261120
  %v60 = vsel %vm58, %v34, 0
  %v63 = vsel %vm58, %v35, 0
  %v66 = vsel %vm58, %v36, 0
  %v69 = vsel %vm58, %v37, 0
  %v72 = vsel %vm58, %v38, 0
  %v75 = vsel %vm58, %v39, 0
  %v78 = vsel %vm58, %v40, 0
  %v81 = vsel %vm58, %v41, 0
  %83 = vmatprep.subr.bf16.mxu0 0
  %84 = vmatpush1.bf16.msra.mxu0 0
  %85 = vmatprep.subr.bf16.mxu0 0
  %86 = vmatpush1.bf16.msra.mxu0 0
  %87 = vmatprep.subr.bf16.mxu0 0
  %88 = vmatpush1.bf16.msra.mxu0 0
  %89 = vmatprep.subr.bf16.mxu0 0
  %90 = vmatpush1.bf16.msra.mxu0 0
  %91 = vmatprep.subr.bf16.mxu0 0
  %92 = vmatpush1.bf16.msra.mxu0 0
  %93 = vmatprep.subr.bf16.mxu0 0
  %94 = vmatpush1.bf16.msra.mxu0 0
  %95 = vmatprep.subr.bf16.mxu0 0
  %96 = vmatpush1.bf16.msra.mxu0 %v55
  %97 = vmatprep.subr.bf16.mxu0 0
  %98 = vmatpush1.bf16.msra.mxu0 %v54
  %99 = vmatprep.subr.bf16.mxu0 0
  %100 = vmatpush2.bf16.msra.mxu0 0
  %101 = vmatprep.subr.bf16.mxu0 0
  %102 = vmatpush2.bf16.msra.mxu0 0
  %103 = vmatprep.subr.bf16.mxu0 0
  %104 = vmatpush2.bf16.msra.mxu0 0
  %105 = vmatprep.subr.bf16.mxu0 0
  %106 = vmatpush2.bf16.msra.mxu0 0
  %107 = vmatprep.subr.bf16.mxu0 0
  %108 = vmatpush2.bf16.msra.mxu0 0
  %109 = vmatprep.subr.bf16.mxu0 0
  %110 = vmatpush2.bf16.msra.mxu0 0
  %111 = vmatprep.subr.bf16.mxu0 0
  %112 = vmatpush2.bf16.msra.mxu0 0
  %113 = vmatprep.subr.bf16.mxu0 0
  %114 = vmatpush2.bf16.msra.mxu0 0
  %115 = vmatprep.mubr.bf16.mxu0 0
  %116 = vmatmul.mubr.bf16.gmra.mxu0 %v60
  %v117 = vpop.f32.mrf.mxu0
  %v118 = vadd.f32 0.0, %v117
  %v119 = vpop.f32.mrf.mxu0
  %v120 = vpop.f32.mrf.mxu0
  %v121 = vadd.f32 0.0, %v120
  %v122 = vpop.f32.mrf.mxu0
  %123 = vmatprep.mubr.bf16.mxu0 0
  %124 = vmatmul.mubr.bf16.gmra.mxu0 %v63
  %v125 = vpop.f32.mrf.mxu0
  %v126 = vadd.f32 0.0, %v125
  %v127 = vpop.f32.mrf.mxu0
  %v128 = vpop.f32.mrf.mxu0
  %v129 = vadd.f32 0.0, %v128
  %v130 = vpop.f32.mrf.mxu0
  %131 = vmatprep.mubr.bf16.mxu0 0
  %132 = vmatmul.mubr.bf16.gmra.mxu0 %v66
  %v133 = vpop.f32.mrf.mxu0
  %v134 = vadd.f32 0.0, %v133
  %v135 = vpop.f32.mrf.mxu0
  %v136 = vpop.f32.mrf.mxu0
  %v137 = vadd.f32 0.0, %v136
  %v138 = vpop.f32.mrf.mxu0
  %139 = vmatprep.mubr.bf16.mxu0 0
  %140 = vmatmul.mubr.bf16.gmra.mxu0 %v69
  %v141 = vpop.f32.mrf.mxu0
  %v142 = vadd.f32 0.0, %v141
  %v143 = vpop.f32.mrf.mxu0
  %v144 = vpop.f32.mrf.mxu0
  %v145 = vadd.f32 0.0, %v144
  %v146 = vpop.f32.mrf.mxu0
  %147 = vmatprep.mubr.bf16.mxu0 0
  %148 = vmatmul.mubr.bf16.gmra.mxu0 %v72
  %v149 = vpop.f32.mrf.mxu0
  %v150 = vadd.f32 0.0, %v149
  %v151 = vpop.f32.mrf.mxu0
  %v152 = vpop.f32.mrf.mxu0
  %v153 = vadd.f32 0.0, %v152
  %v154 = vpop.f32.mrf.mxu0
  %155 = vmatprep.mubr.bf16.mxu0 0
  %156 = vmatmul.mubr.bf16.gmra.mxu0 %v75
  %v157 = vpop.f32.mrf.mxu0
  %v158 = vadd.f32 0.0, %v157
  %v159 = vpop.f32.mrf.mxu0
  %v160 = vpop.f32.mrf.mxu0
  %v161 = vadd.f32 0.0, %v160
  %v162 = vpop.f32.mrf.mxu0
  %163 = vmatprep.mubr.bf16.mxu0 0
  %164 = vmatmul.mubr.bf16.gmra.mxu0 %v78
  %v165 = vpop.f32.mrf.mxu0
  %v166 = vadd.f32 0.0, %v165
  %v167 = vpop.f32.mrf.mxu0
  %v168 = vpop.f32.mrf.mxu0
  %v169 = vadd.f32 0.0, %v168
  %v170 = vpop.f32.mrf.mxu0
  %171 = vmatprep.mubr.bf16.mxu0 0
  %172 = vmatmul.mubr.bf16.gmra.mxu0 %v81
  %v173 = vpop.f32.mrf.mxu0
  %v174 = vadd.f32 0.0, %v173
  %v175 = vpop.f32.mrf.mxu0
  %v176 = vpop.f32.mrf.mxu0
  %v177 = vadd.f32 0.0, %v176
  %v178 = vpop.f32.mrf.mxu0
  %179 = vdwg.mxu0
  %vm180 = vcmask 523264
  %v181 = vsel %vm180, %v118, 0.0
  %v182 = vsel %vm180, %v121, 0.0
  %v183 = vadd.f32 %v181, %v182
  %v184 = vsel %vm180, %v126, 0.0
  %v185 = vadd.f32 %v183, %v184
  %v186 = vsel %vm180, %v129, 0.0
  %v187 = vadd.f32 %v185, %v186
  %v188 = vsel %vm180, %v134, 0.0
  %v189 = vadd.f32 %v187, %v188
  %v190 = vsel %vm180, %v137, 0.0
  %v191 = vadd.f32 %v189, %v190
  %v192 = vsel %vm180, %v142, 0.0
  %v193 = vadd.f32 %v191, %v192
  %v194 = vsel %vm180, %v145, 0.0
  %v195 = vadd.f32 %v193, %v194
  %v196 = vsel %vm180, %v150, 0.0
  %v197 = vadd.f32 %v195, %v196
  %v198 = vsel %vm180, %v153, 0.0
  %v199 = vadd.f32 %v197, %v198
  %v200 = vsel %vm180, %v158, 0.0
  %v201 = vadd.f32 %v199, %v200
  %v202 = vsel %vm180, %v161, 0.0
  %v203 = vadd.f32 %v201, %v202
  %v204 = vsel %vm180, %v166, 0.0
  %v205 = vadd.f32 %v203, %v204
  %v206 = vsel %vm180, %v169, 0.0
  %v207 = vadd.f32 %v205, %v206
  %v208 = vsel %vm180, %v174, 0.0
  %v209 = vadd.f32 %v207, %v208
  %v210 = vsel %vm180, %v177, 0.0
  %v211 = vadd.f32 %v209, %v210
  %v212 = vrot.slane %v211, 4
  %v213 = vadd.f32 %v211, %v212
  %v214 = vrot.slane %v213, 2
  %v215 = vadd.f32 %v213, %v214
  %v216 = vrot.slane %v215, 1
  %v217 = vadd.f32 %v215, %v216
  %v218 = vmul.f32 %v217, 0.0078125
  %v219 = vmul.f32 %v118, %v118
  %v220 = vmul.f32 %v121, %v121
  %v221 = vmul.f32 %v126, %v126
  %v222 = vmul.f32 %v129, %v129
  %v223 = vmul.f32 %v134, %v134
  %v224 = vmul.f32 %v137, %v137
  %v225 = vmul.f32 %v142, %v142
  %v226 = vmul.f32 %v145, %v145
  %v227 = vmul.f32 %v150, %v150
  %v228 = vmul.f32 %v153, %v153
  %v229 = vmul.f32 %v158, %v158
  %v230 = vmul.f32 %v161, %v161
  %v231 = vmul.f32 %v166, %v166
  %v232 = vmul.f32 %v169, %v169
  %v233 = vmul.f32 %v174, %v174
  %v234 = vmul.f32 %v177, %v177
  %v235 = vsel %vm180, %v219, 0.0
  %v236 = vsel %vm180, %v220, 0.0
  %v237 = vadd.f32 %v235, %v236
  %v238 = vsel %vm180, %v221, 0.0
  %v239 = vadd.f32 %v237, %v238
  %v240 = vsel %vm180, %v222, 0.0
  %v241 = vadd.f32 %v239, %v240
  %v242 = vsel %vm180, %v223, 0.0
  %v243 = vadd.f32 %v241, %v242
  %v244 = vsel %vm180, %v224, 0.0
  %v245 = vadd.f32 %v243, %v244
  %v246 = vsel %vm180, %v225, 0.0
  %v247 = vadd.f32 %v245, %v246
  %v248 = vsel %vm180, %v226, 0.0
  %v249 = vadd.f32 %v247, %v248
  %v250 = vsel %vm180, %v227, 0.0
  %v251 = vadd.f32 %v249, %v250
  %v252 = vsel %vm180, %v228, 0.0
  %v253 = vadd.f32 %v251, %v252
  %v254 = vsel %vm180, %v229, 0.0
  %v255 = vadd.f32 %v253, %v254
  %v256 = vsel %vm180, %v230, 0.0
  %v257 = vadd.f32 %v255, %v256
  %v258 = vsel %vm180, %v231, 0.0
  %v259 = vadd.f32 %v257, %v258
  %v260 = vsel %vm180, %v232, 0.0
  %v261 = vadd.f32 %v259, %v260
  %v262 = vsel %vm180, %v233, 0.0
  %v263 = vadd.f32 %v261, %v262
  %v264 = vsel %vm180, %v234, 0.0
  %v265 = vadd.f32 %v263, %v264
  %v266 = vrot.slane %v265, 4
  %v267 = vadd.f32 %v265, %v266
  %v268 = vrot.slane %v267, 2
  %v269 = vadd.f32 %v267, %v268
  %v270 = vrot.slane %v269, 1
  %v271 = vadd.f32 %v269, %v270
  %v272 = vmul.f32 %v271, 0.0078125
  %v273 = vmul.f32 %v218, %v218
  %v274 = vsub.f32 %v272, %v273
  %v275 = vmax.f32 %v274, 0.0
  %v276 = vld [vmem:[%s2] sm:$0x1]
  %v277 = vadd.f32 %v275, 1e-05
  %v278 = vrsqrt.pop %v277
  %v279 = vmul.f32 %v276, %v278
  %v280 = vld [vmem:[%s3] sm:$0x1]
  %v281 = vmul.f32 %v218, %v279
  %v282 = vsub.f32 %v280, %v281
  %v284 = vlaneseq
  %v285 = vshrl.u32 %v284, 7
  %v286 = vsub.s32 0, %v285
  %v287 = vrot.slane %v279, %v286
  %v289 = vmul.f32 %v118, %v287
  %v290 = vmul.f32 %v121, %v287
  %v291 = vmul.f32 %v126, %v287
  %v292 = vmul.f32 %v129, %v287
  %v293 = vmul.f32 %v134, %v287
  %v294 = vmul.f32 %v137, %v287
  %v295 = vmul.f32 %v142, %v287
  %v296 = vmul.f32 %v145, %v287
  %v297 = vmul.f32 %v150, %v287
  %v298 = vmul.f32 %v153, %v287
  %v299 = vmul.f32 %v158, %v287
  %v300 = vmul.f32 %v161, %v287
  %v301 = vmul.f32 %v166, %v287
  %v302 = vmul.f32 %v169, %v287
  %v303 = vmul.f32 %v174, %v287
  %v304 = vmul.f32 %v177, %v287
  %v306 = vlaneseq
  %v307 = vshrl.u32 %v306, 7
  %v308 = vsub.s32 0, %v307
  %v309 = vrot.slane %v282, %v308
  %v311 = vadd.f32 %v289, %v309
  %v312 = vadd.f32 %v290, %v309
  %v313 = vadd.f32 %v291, %v309
  %v314 = vadd.f32 %v292, %v309
  %v315 = vadd.f32 %v293, %v309
  %v316 = vadd.f32 %v294, %v309
  %v317 = vadd.f32 %v295, %v309
  %v318 = vadd.f32 %v296, %v309
  %v319 = vadd.f32 %v297, %v309
  %v320 = vadd.f32 %v298, %v309
  %v321 = vadd.f32 %v299, %v309
  %v322 = vadd.f32 %v300, %v309
  %v323 = vadd.f32 %v301, %v309
  %v324 = vadd.f32 %v302, %v309
  %v325 = vadd.f32 %v303, %v309
  %v326 = vadd.f32 %v304, %v309
  %327 = vst.msk [vmem:[%s4] sm:$0xff] %vm180, %v311
  %328 = vst.msk [vmem:[%s4 + $0x8] sm:$0xff] %vm180, %v312
  %329 = vst.msk [vmem:[%s4 + $0x10] sm:$0xff] %vm180, %v313
  %330 = vst.msk [vmem:[%s4 + $0x18] sm:$0xff] %vm180, %v314
  %331 = vst.msk [vmem:[%s4 + $0x20] sm:$0xff] %vm180, %v315
  %332 = vst.msk [vmem:[%s4 + $0x28] sm:$0xff] %vm180, %v316
  %333 = vst.msk [vmem:[%s4 + $0x30] sm:$0xff] %vm180, %v317
  %334 = vst.msk [vmem:[%s4 + $0x38] sm:$0xff] %vm180, %v318
  %335 = vst.msk [vmem:[%s4 + $0x40] sm:$0xff] %vm180, %v319
  %336 = vst.msk [vmem:[%s4 + $0x48] sm:$0xff] %vm180, %v320
  %337 = vst.msk [vmem:[%s4 + $0x50] sm:$0xff] %vm180, %v321
  %338 = vst.msk [vmem:[%s4 + $0x58] sm:$0xff] %vm180, %v322
  %339 = vst.msk [vmem:[%s4 + $0x60] sm:$0xff] %vm180, %v323
  %340 = vst.msk [vmem:[%s4 + $0x68] sm:$0xff] %vm180, %v324
  %341 = vst.msk [vmem:[%s4 + $0x70] sm:$0xff] %vm180, %v325
  %342 = vst.msk [vmem:[%s4 + $0x78] sm:$0xff] %vm180, %v326
  // Predicated region
  $region18: #{tpu_custom_call.1} parent=0 // pred_check
    _
  $region19: #{tpu_custom_call.1} parent=0 // pred_check_branch
    %344 = sbr.rel (0) target = $region21
  $region20: #{tpu_custom_call.1} parent=0 // pred_region
    _
  $region21: #{tpu_custom_call.1} parent=0 // pred_fallthru
    _
  // Predicated region
  $region22: #{tpu_custom_call.1} parent=0 // pred_check
    _
  $region23: #{tpu_custom_call.1} parent=0 // pred_check_branch
    %346 = sbr.rel (0) target = $region25
  $region24: #{tpu_custom_call.1} parent=0 // pred_region
    _
  $region25: #{tpu_custom_call.1} parent=0 // pred_fallthru
    _

</llo_original>
